<compile_context>
chip_gen: v5e
topology: v5e:2x2
jax: 0.10.0
libtpu: 0.0.40
codegen_flags: <defaults>
</compile_context>

<pallas_src>
import numpy as np
from functools import lru_cache

import jax
import jax.numpy as jnp
from jax import lax
from jax.experimental import pallas as pl
from jax.experimental.pallas import tpu as pltpu


_LANES = 128      # pad the cluster axis to a multiple of 128 (lane-dense)
_SUBLANES = 8


def _round_up(x, m):
    return ((x + m - 1) // m) * m


# ----------------------------------------------------------------------------
# Pallas kernel
# ----------------------------------------------------------------------------
def _make_kernel(alpha, tile_n):
    alpha = float(alpha)

    def kernel(n_sref,          # SMEM scalar prefetch: [n_real] int32
               x_ref,           # (TILE_N, D_pad)  f32/bf16   (streamed)
               xx_ref,          # (TILE_N, 1)      f32 ||x||^2 (streamed, host-precomputed)
               meta_ref,        # (TILE_N, 2)      i32 [label, member-cluster idx] (streamed)
               ct2_ref,         # (D_pad, C_pad)   f32/bf16 2*centers^T (resident)
               yy_ref,          # (1, C_pad)       f32 ||c||^2; padded cols = -1e30 (resident)
               scale_ref,       # (1, C_pad)       f32 size^2/(size-1)^2 per cluster (resident)
               tc_ref,          # (1, C_pad)       i32 cluster labels (-2 pad) (resident)
               out_ref,         # (8, 128)         f32 accumulator slab
               colids_ref):     # (TILE_N, C_pad)  i32 scratch: column-index iota
        i = pl.program_id(0)

        @pl.when(i == 0)
        def _init():
            out_ref[...] = jnp.zeros_like(out_ref)
            # Filled once; scratch persists across grid steps -> no per-tile iota.
            colids_ref[...] = lax.broadcasted_iota(jnp.int32, colids_ref.shape, 1)

        meta = meta_ref[...]
        t_col = meta[:, 0:1]            # sample label
        mem_col = meta[:, 1:2]          # index of the sample's own cluster

        # MXU: x @ (2 c)^T  -- RHS is already (K=D sublane, N=C_pad lane-dense),
        # so no in-kernel transpose and no *2 VPU pass.
        xc2 = lax.dot_general(x_ref[...], ct2_ref[...],
                              (((1,), (0,)), ((), ())),
                              preferred_element_type=jnp.float32)   # (TILE_N, C_pad)

        # pair_euclidean_dist = ||x||^2 + ||c||^2 - 2 x c^T.
        # Padded cluster columns carry ||c||^2 = -1e30 -> dist hugely negative
        # -> never "valid" (replaces the old colmask input).
        raw = xx_ref[...] + yy_ref[...] - xc2

        # cluster_mat reconstruction: size^2/(size-1)^2 on the sample's own
        # cluster column, 1 everywhere else.
        member_mask = colids_ref[...] == mem_col
        dist = raw * jnp.where(member_mask, scale_ref[...], 1.0)

        pos_mask = t_col == tc_ref[...]                    # int32 compare
        valid = dist > 0.001
        validf = valid.astype(jnp.float32)
        posf = jnp.logical_and(pos_mask, valid).astype(jnp.float32)

        # TODO(synk): if a bundle dump shows the 2 XLU slots saturating first
        # (v6e/v7x), offload these six lane-sums to the idle MXU as matmuls
        # against a ones(C_pad, 1) column, leaving only dmax/dmin on the XLU.
        an_cnt = jnp.sum(validf, axis=1, keepdims=True)
        ap_cnt = jnp.sum(posf, axis=1, keepdims=True)
        # NOTE: rows with no valid positive column contribute 0 to dist_ap
        # (the PyTorch reference would produce NaN for that degenerate case).
        dist_an_row = jnp.sum(dist * validf, axis=1, keepdims=True) / jnp.maximum(an_cnt, 1.0)
        dist_ap_row = jnp.sum(dist * posf, axis=1, keepdims=True) / jnp.maximum(ap_cnt, 1.0)

        dmax = jnp.max(jnp.where(valid, dist, -jnp.inf), axis=1, keepdims=True)
        dmin = jnp.min(jnp.where(valid, dist, jnp.inf), axis=1, keepdims=True)
        base = jnp.where(an_cnt > 0.0, (dmax + dmin) * 0.5, 0.0)

        # Mask BEFORE the exp: invalid/padded columns get argument 0, so they
        # can never overflow to inf (inf * 0 -> NaN would poison real rows).
        d_safe = jnp.where(valid, dist, base)
        e = jnp.exp(-alpha * (d_safe - base))
        pos_exp = jnp.sum(e * posf, axis=1, keepdims=True)
        a_exp = jnp.sum(e * validf, axis=1, keepdims=True)
        loss_row = -jnp.log(pos_exp / a_exp)                         # (TILE_N, 1)

        # Mask padded rows (global row index >= n_real).
        n_real = n_sref[0]
        row_ids = i * tile_n + lax.broadcasted_iota(jnp.int32, (tile_n, 1), 0)
        rv = row_ids < n_real

        match_row = jnp.where(jnp.logical_and(rv, loss_row < 0.3), 1.0, 0.0)
        loss_row = jnp.where(rv, loss_row, 0.0)
        ap_row = jnp.where(rv, dist_ap_row, 0.0)
        an_row = jnp.where(rv, dist_an_row, 0.0)

        loss_s = jnp.sum(loss_row, axis=0, keepdims=True)            # (1, 1)
        match_s = jnp.sum(match_row, axis=0, keepdims=True)
        ap_s = jnp.sum(ap_row, axis=0, keepdims=True)
        an_s = jnp.sum(an_row, axis=0, keepdims=True)

        # Pack the four partial sums into lanes {0,1,2,3} of the lane-dense
        # (8, 128) accumulator slab (single output DMA, no masked 1x1 stores).
        lane = lax.broadcasted_iota(jnp.int32, (1, out_ref.shape[1]), 1)
        contrib = (jnp.where(lane == 0, loss_s, 0.0)
                   + jnp.where(lane == 1, match_s, 0.0)
                   + jnp.where(lane == 2, ap_s, 0.0)
                   + jnp.where(lane == 3, an_s, 0.0))
        out_ref[...] += contrib          # broadcast over the 8 sublanes

    return kernel


_DTYPES = {"float32": (jnp.float32, 4), "bfloat16": (jnp.bfloat16, 2)}


@lru_cache(maxsize=None)
def _build_kernel_call(d_pad, c_pad, tile_n, n_tiles, dtype_name, alpha):
    _, itemsize = _DTYPES[dtype_name]

    # Explicit VMEM budget: double-buffered streamed tiles + resident RHS/rows
    # + col-id scratch + live (TILE_N, C_pad) f32 intermediates.
    budget = (2 * tile_n * d_pad * itemsize          # x tile
              + 2 * tile_n * _LANES * 4              # ||x||^2 col (lane-padded)
              + 2 * tile_n * _LANES * 4              # meta cols (lane-padded)
              + 2 * d_pad * c_pad * itemsize         # resident 2*centers^T
              + 2 * 3 * _SUBLANES * c_pad * 4        # yy / scale / tc rows
              + tile_n * c_pad * 4                   # col-id iota scratch
              + 12 * tile_n * c_pad * 4              # live f32 intermediates
              + 2 * _SUBLANES * _LANES * 4)          # output slab
    vmem_limit = int(min(48 << 20, max(16 << 20, 2 * budget)))

    row_map = lambda i, n_s: (i, 0)
    const_map = lambda i, n_s: (0, 0)

    call = pl.pallas_call(
        _make_kernel(alpha, tile_n),
        out_shape=jax.ShapeDtypeStruct((_SUBLANES, _LANES), jnp.float32),
        grid_spec=pltpu.PrefetchScalarGridSpec(
            num_scalar_prefetch=1,
            grid=(n_tiles,),
            in_specs=[
                pl.BlockSpec((tile_n, d_pad), row_map),    # x            (streamed)
                pl.BlockSpec((tile_n, 1), row_map),        # ||x||^2      (streamed)
                pl.BlockSpec((tile_n, 2), row_map),        # label/member (streamed)
                pl.BlockSpec((d_pad, c_pad), const_map),   # 2*centers^T  (resident)
                pl.BlockSpec((1, c_pad), const_map),       # ||c||^2 (-1e30 on pad cols)
                pl.BlockSpec((1, c_pad), const_map),       # per-cluster scale
                pl.BlockSpec((1, c_pad), const_map),       # cluster labels (i32)
            ],
            out_specs=pl.BlockSpec((_SUBLANES, _LANES), lambda i, n_s: (0, 0)),
            scratch_shapes=[pltpu.VMEM((tile_n, c_pad), jnp.int32)],
        ),
        # TODO(synk): on v7x use a CORE_PARALLEL leading axis / pl.core_map to
        # split row tiles across the two TensorCores; single-TC v5e/v6e keep
        # the plain single "arbitrary" reduction axis.
        compiler_params=pltpu.CompilerParams(
            dimension_semantics=("arbitrary",),
            vmem_limit_bytes=vmem_limit),
    )
    return jax.jit(call)


# ----------------------------------------------------------------------------
# Host-side glue: deterministic clustering + per-cluster metadata
# ----------------------------------------------------------------------------
def _simple_kmeans_labels(X, k, iters=20):
    k = min(k, X.shape[0])
    centers = X[:k].copy()
    labels = np.zeros(X.shape[0], dtype=np.int64)
    for _ in range(iters):
        d = ((X[:, None, :] - centers[None, :, :]) ** 2).sum(-1)
        labels = d.argmin(1)
        for j in range(k):
            if np.any(labels == j):
                centers[j] = X[labels == j].mean(0)
    return labels


def _cluster_split(X, y, n_clusters_inner=3):
    # TODO(synk): sklearn KMeans(random_state=1) is host-side / data-dependent;
    # replaced by deterministic NumPy Lloyd's, grouping per (label, sub-cluster).
    result = {}
    for y_ in sorted(set(int(v) for v in y)):
        idx = np.where(y == y_)[0]
        labels = _simple_kmeans_labels(X[idx], n_clusters_inner)
        for pos, i in enumerate(idx):
            result.setdefault((y_, int(labels[pos])), []).append(int(i))
    return list(result.values())


def _prepare(X, y, n_clusters_inner=3):
    split_ = _cluster_split(X, y, n_clusters_inner)
    n, d = X.shape
    C = len(split_)
    centers = np.zeros((C, d), dtype=np.float32)
    scale = np.ones((C,), dtype=np.float32)
    targets_ = np.zeros((C,), dtype=np.int32)
    member = np.zeros((n,), dtype=np.int32)
    for i, split_i in enumerate(split_):
        size_ = len(split_i)
        if size_ > 1:
            scale[i] = float(size_ * size_) / ((size_ - 1) * (size_ - 1))
        targets_[i] = int(y[split_i[0]])
        centers[i] = X[split_i].mean(axis=0)
        for k in split_i:
            member[k] = i
    return centers, scale, targets_, member


# ----------------------------------------------------------------------------
# Forward wrapper
# ----------------------------------------------------------------------------
def kmean_loss_forward(inputs, targets, alpha=16.0, tile_n=512, use_bf16_matmul=False):
    X = np.asarray(inputs, dtype=np.float32)     # single D2H if inputs is on device
    y = np.asarray(targets)
    n, d = X.shape
    centers, scale, targets_, member = _prepare(X, y)
    C = centers.shape[0]
    c_pad = _round_up(max(C, _LANES), _LANES)

    # Row tiling: TILE_N multiple of 8 (16 for bf16 sublane packing); ~512-row
    # default amortizes the ~0.35 us per-grid-step overhead while staying far
    # under the explicit VMEM budget.
    mult = 16 if use_bf16_matmul else _SUBLANES
    d_pad = _round_up(d, mult)
    tile_n = max(mult, min(int(tile_n), _round_up(n, mult)))
    tile_n = _round_up(tile_n, mult)
    n_tiles = pl.cdiv(n, tile_n)
    n_padded = n_tiles * tile_n

    # Host-side packing.  Padded rows: label/member = -1 (masked via n_real).
    # Padded cluster columns: ||c||^2 = -1e30 -> dist << 0 -> never valid.
    x_pad = np.zeros((n_padded, d_pad), np.float32)
    x_pad[:n, :d] = X
    xx_col = np.zeros((n_padded, 1), np.float32)
    xx_col[:n, 0] = (X * X).sum(1)
    meta = np.full((n_padded, 2), -1, dtype=np.int32)
    meta[:n, 0] = y.astype(np.int32)
    meta[:n, 1] = member

    ct2 = np.zeros((d_pad, c_pad), np.float32)
    ct2[:d, :C] = (2.0 * centers).T                      # factor 2 folded on host
    yy_row = np.full((1, c_pad), -1e30, np.float32)
    yy_row[0, :C] = (centers ** 2).sum(1)
    scale_row = np.ones((1, c_pad), np.float32)
    scale_row[0, :C] = scale
    tc_row = np.full((1, c_pad), -2, dtype=np.int32)
    tc_row[0, :C] = targets_

    dtype_name = "bfloat16" if use_bf16_matmul else "float32"
    mxu_dtype = _DTYPES[dtype_name][0]
    fn = _build_kernel_call(d_pad, c_pad, tile_n, n_tiles, dtype_name, float(alpha))

    out = fn(jnp.asarray([n], dtype=jnp.int32),
             jnp.asarray(x_pad).astype(mxu_dtype),
             jnp.asarray(xx_col),
             jnp.asarray(meta),
             jnp.asarray(ct2).astype(mxu_dtype),
             jnp.asarray(yy_row),
             jnp.asarray(scale_row),
             jnp.asarray(tc_row))

    # Lanes: 0 loss-sum, 1 nmatch, 2 ap-sum, 3 an-sum (all 8 sublanes identical).
    inv_n = 1.0 / float(n)
    loss = out[0, 0] * inv_n                       # stays a device scalar
    rest = np.asarray(out[0, 1:4])
    accuracy = float(rest[0]) * inv_n
    dist_ap = float(rest[1]) * inv_n
    dist_an = float(rest[2]) * inv_n
    return loss, accuracy, dist_ap, dist_an


# ----------------------------------------------------------------------------
# Pure-NumPy reference (mirrors the PyTorch forward) for a sanity check
# ----------------------------------------------------------------------------
def _reference_forward(X, y, alpha=16.0):
    centers, scale, targets_, member = _prepare(X, y)
    n = X.shape[0]
    C = centers.shape[0]
    cluster_mat = np.ones((n, C), dtype=np.float32)
    cluster_mat[np.arange(n), member] = scale[member]
    xx = (X ** 2).sum(1, keepdims=True)
    yy = (centers ** 2).sum(1, keepdims=True).T
    dist = (xx + yy - 2.0 * X @ centers.T) * cluster_mat
    losses, aps, ans, nmatch = [], [], [], 0
    for i in range(n):
        row = dist[i]
        pos = row[(targets_ == int(y[i])) & (row > 0.001)]
        val = row[row > 0.001]
        aps.append(pos.mean())
        ans.append(val.mean())
        base = (val.max() + val.min()) / 2.0
        pe = np.exp(-alpha * (pos - base)).sum()
        ae = np.exp(-alpha * (val - base)).sum()
        l = -np.log(pe / ae)
        losses.append(l)
        if l < 0.3:
            nmatch += 1
    return (float(np.mean(losses)), nmatch / n,
            float(np.mean(aps)), float(np.mean(ans)))


if __name__ == "__main__":
    key = jax.random.PRNGKey(0)
    n, d = 8, 32
    # small feature scale keeps exp(-alpha * (dist - base)) well-conditioned
    inputs = 0.05 * jax.random.normal(key, (n, d), dtype=jnp.float32)
    targets = jnp.array([0, 0, 0, 0, 1, 1, 1, 1], dtype=jnp.int32)

    X_np = np.asarray(jax.device_get(inputs), dtype=np.float32)
    y_np = np.asarray(jax.device_get(targets))
    r_loss, r_acc, r_ap, r_an = _reference_forward(X_np, y_np, alpha=16.0)

    # f32-MXU path (default): tight check against the NumPy reference
    loss, acc, dist_ap, dist_an = kmean_loss_forward(
        inputs, targets, alpha=16.0, use_bf16_matmul=False)
    loss = jax.block_until_ready(loss)
    assert np.isfinite(float(loss)), "loss is not finite"
    assert np.allclose(float(loss), r_loss, rtol=2e-3, atol=1e-4), (float(loss), r_loss)
    assert np.allclose(dist_ap, r_ap, rtol=2e-3, atol=1e-5), (dist_ap, r_ap)
    assert np.allclose(dist_an, r_an, rtol=2e-3, atol=1e-5), (dist_an, r_an)

    # bf16-MXU path (opt-in; halves x/center DMA bytes): loose sanity check
    loss_b, acc_b, ap_b, an_b = kmean_loss_forward(
        inputs, targets, alpha=16.0, use_bf16_matmul=True)
    loss_b = float(jax.block_until_ready(loss_b))
    assert np.isfinite(loss_b), "bf16 loss is not finite"
    assert abs(loss_b - r_loss) < 0.25, (loss_b, r_loss)
    assert abs(ap_b - r_ap) < 0.05 and abs(an_b - r_an) < 0.05, (ap_b, r_ap, an_b, r_an)

    print("KERNEL_OK")
</pallas_src>

<mosaic_0001>
module attributes {stable_mosaic.version = 11 : i64} {
  func.func @kernel(%arg0: i32, %arg1: memref<1xi32, #tpu.memory_space<smem>>, %arg2: memref<8x32xf32, #tpu.memory_space<vmem>>, %arg3: memref<8x1xf32, #tpu.memory_space<vmem>>, %arg4: memref<8x2xi32, #tpu.memory_space<vmem>>, %arg5: memref<32x128xf32, #tpu.memory_space<vmem>>, %arg6: memref<1x128xf32, #tpu.memory_space<vmem>>, %arg7: memref<1x128xf32, #tpu.memory_space<vmem>>, %arg8: memref<1x128xi32, #tpu.memory_space<vmem>>, %arg9: memref<8x128xf32, #tpu.memory_space<vmem>>, %arg10: memref<8x128xi32, #tpu.memory_space<vmem>>) attributes {dimension_semantics = [#tpu.dimension_semantics<arbitrary>], iteration_bounds = array<i64: 1>, scalar_prefetch = 1 : i64, scratch_operands = 1 : i64, tpu.core_type = #tpu.core_type<tc>, window_params = [{transform_indices = @transform_0, window_bounds = array<i64: 8, 32>}, {transform_indices = @transform_1, window_bounds = array<i64: 8, 1>}, {transform_indices = @transform_2, window_bounds = array<i64: 8, 2>}, {pipeline_mode = #tpu.pipeline_mode<synchronous>, transform_indices = @transform_3, window_bounds = array<i64: 32, 128>}, {pipeline_mode = #tpu.pipeline_mode<synchronous>, transform_indices = @transform_4, window_bounds = array<i64: 1, 128>}, {pipeline_mode = #tpu.pipeline_mode<synchronous>, transform_indices = @transform_5, window_bounds = array<i64: 1, 128>}, {pipeline_mode = #tpu.pipeline_mode<synchronous>, transform_indices = @transform_6, window_bounds = array<i64: 1, 128>}, {pipeline_mode = #tpu.pipeline_mode<synchronous>, transform_indices = @transform_7, window_bounds = array<i64: 8, 128>}]} {
    %c0_i32 = arith.constant 0 : i32
    %0 = arith.cmpi eq, %arg0, %c0_i32 : i32
    %1 = arith.extui %0 : i1 to i32
    %c0_i32_0 = arith.constant 0 : i32
    %2 = arith.cmpi ne, %1, %c0_i32_0 : i32
    scf.if %2 {
      %cst_55 = arith.constant 0.000000e+00 : f32
      %143 = vector.broadcast %cst_55 : f32 to vector<8x128xf32>
      %c0_56 = arith.constant 0 : index
      %c0_57 = arith.constant 0 : index
      %144 = vector.load %arg9[%c0_56, %c0_57] : memref<8x128xf32, #tpu.memory_space<vmem>>, vector<8x128xf32>
      tpu.vector_store %arg9[%c0_56, %c0_57], %143 {strides = array<i32>} : memref<8x128xf32, #tpu.memory_space<vmem>>, vector<8x128xf32>,
      %145 = tpu.iota {dimensions = array<i32: 1>} : vector<8x128xi32>
      %c0_58 = arith.constant 0 : index
      %c0_59 = arith.constant 0 : index
      %146 = vector.load %arg10[%c0_58, %c0_59] : memref<8x128xi32, #tpu.memory_space<vmem>>, vector<8x128xi32>
      tpu.vector_store %arg10[%c0_58, %c0_59], %145 {strides = array<i32>} : memref<8x128xi32, #tpu.memory_space<vmem>>, vector<8x128xi32>,
    } else {
    }
    %c0 = arith.constant 0 : index
    %c0_1 = arith.constant 0 : index
    %3 = vector.load %arg4[%c0, %c0_1] : memref<8x2xi32, #tpu.memory_space<vmem>>, vector<8x2xi32>
    %4 = vector.extract_strided_slice %3 {offsets = [0, 0], sizes = [8, 1], strides = [1, 1]} : vector<8x2xi32> to vector<8x1xi32>
    %5 = vector.extract_strided_slice %3 {offsets = [0, 1], sizes = [8, 1], strides = [1, 1]} : vector<8x2xi32> to vector<8x1xi32>
    %c0_2 = arith.constant 0 : index
    %c0_3 = arith.constant 0 : index
    %6 = vector.load %arg2[%c0_2, %c0_3] : memref<8x32xf32, #tpu.memory_space<vmem>>, vector<8x32xf32>
    %c0_4 = arith.constant 0 : index
    %c0_5 = arith.constant 0 : index
    %7 = vector.load %arg5[%c0_4, %c0_5] : memref<32x128xf32, #tpu.memory_space<vmem>>, vector<32x128xf32>
    %cst = arith.constant dense<0.000000e+00> : vector<8x128xf32>
    %8 = tpu.matmul %6, %7, %cst {dimension_numbers = #tpu.dot_dimension_numbers<[1], [0], [0], [1], [0, 0, 1, 1], [], []>} : vector<8x32xf32>, vector<32x128xf32>, vector<8x128xf32> -> vector<8x128xf32>
    %c0_6 = arith.constant 0 : index
    %c0_7 = arith.constant 0 : index
    %9 = vector.load %arg3[%c0_6, %c0_7] : memref<8x1xf32, #tpu.memory_space<vmem>>, vector<8x1xf32>
    %c0_8 = arith.constant 0 : index
    %c0_9 = arith.constant 0 : index
    %10 = vector.load %arg6[%c0_8, %c0_9] : memref<1x128xf32, #tpu.memory_space<vmem>>, vector<1x128xf32>
    %11 = vector.broadcast %9 : vector<8x1xf32> to vector<8x128xf32>
    %12 = vector.broadcast %10 : vector<1x128xf32> to vector<8x128xf32>
    %13 = arith.addf %11, %12 : vector<8x128xf32>
    %14 = arith.subf %13, %8 : vector<8x128xf32>
    %c0_10 = arith.constant 0 : index
    %c0_11 = arith.constant 0 : index
    %15 = vector.load %arg10[%c0_10, %c0_11] : memref<8x128xi32, #tpu.memory_space<vmem>>, vector<8x128xi32>
    %16 = vector.broadcast %5 : vector<8x1xi32> to vector<8x128xi32>
    %17 = arith.cmpi eq, %15, %16 : vector<8x128xi32>
    %c0_12 = arith.constant 0 : index
    %c0_13 = arith.constant 0 : index
    %18 = vector.load %arg7[%c0_12, %c0_13] : memref<1x128xf32, #tpu.memory_space<vmem>>, vector<1x128xf32>
    %cst_14 = arith.constant 1.000000e+00 : f32
    %19 = vector.shape_cast %18 : vector<1x128xf32> to vector<1x128xf32>
    %20 = vector.broadcast %19 : vector<1x128xf32> to vector<8x128xf32>
    %21 = vector.broadcast %cst_14 : f32 to vector<8x128xf32>
    %22 = arith.select %17, %20, %21 : vector<8x128xi1>, vector<8x128xf32>
    %23 = arith.mulf %14, %22 : vector<8x128xf32>
    %c0_15 = arith.constant 0 : index
    %c0_16 = arith.constant 0 : index
    %24 = vector.load %arg8[%c0_15, %c0_16] : memref<1x128xi32, #tpu.memory_space<vmem>>, vector<1x128xi32>
    %25 = vector.broadcast %4 : vector<8x1xi32> to vector<8x128xi32>
    %26 = vector.broadcast %24 : vector<1x128xi32> to vector<8x128xi32>
    %27 = arith.cmpi eq, %25, %26 : vector<8x128xi32>
    %cst_17 = arith.constant 1.000000e-03 : f32
    %28 = vector.broadcast %cst_17 : f32 to vector<8x128xf32>
    %29 = arith.cmpf ogt, %23, %28 : vector<8x128xf32>
    %30 = arith.extui %29 : vector<8x128xi1> to vector<8x128xi32>
    %31 = arith.sitofp %30 : vector<8x128xi32> to vector<8x128xf32>
    %32 = arith.andi %27, %29 : vector<8x128xi1>
    %33 = arith.extui %32 : vector<8x128xi1> to vector<8x128xi32>
    %34 = arith.sitofp %33 : vector<8x128xi32> to vector<8x128xf32>
    %cst_18 = arith.constant dense<0.000000e+00> : vector<8xf32>
    %35 = vector.multi_reduction <add>, %31, %cst_18 [1] : vector<8x128xf32> to vector<8xf32>
    %36 = vector.shape_cast %35 : vector<8xf32> to vector<8x1xf32>
    %cst_19 = arith.constant dense<0.000000e+00> : vector<8xf32>
    %37 = vector.multi_reduction <add>, %34, %cst_19 [1] : vector<8x128xf32> to vector<8xf32>
    %38 = vector.shape_cast %37 : vector<8xf32> to vector<8x1xf32>
    %39 = arith.mulf %23, %31 : vector<8x128xf32>
    %cst_20 = arith.constant dense<0.000000e+00> : vector<8xf32>
    %40 = vector.multi_reduction <add>, %39, %cst_20 [1] : vector<8x128xf32> to vector<8xf32>
    %41 = vector.shape_cast %40 : vector<8xf32> to vector<8x1xf32>
    %cst_21 = arith.constant 1.000000e+00 : f32
    %42 = vector.broadcast %cst_21 : f32 to vector<8x1xf32>
    %43 = arith.maximumf %36, %42 : vector<8x1xf32>
    %44 = arith.divf %41, %43 : vector<8x1xf32>
    %45 = arith.mulf %23, %34 : vector<8x128xf32>
    %cst_22 = arith.constant dense<0.000000e+00> : vector<8xf32>
    %46 = vector.multi_reduction <add>, %45, %cst_22 [1] : vector<8x128xf32> to vector<8xf32>
    %47 = vector.shape_cast %46 : vector<8xf32> to vector<8x1xf32>
    %cst_23 = arith.constant 1.000000e+00 : f32
    %48 = vector.broadcast %cst_23 : f32 to vector<8x1xf32>
    %49 = arith.maximumf %38, %48 : vector<8x1xf32>
    %50 = arith.divf %47, %49 : vector<8x1xf32>
    %cst_24 = arith.constant 0xFF800000 : f32
    %51 = vector.broadcast %cst_24 : f32 to vector<8x128xf32>
    %52 = arith.select %29, %23, %51 : vector<8x128xi1>, vector<8x128xf32>
    %cst_25 = arith.constant dense<0xFF800000> : vector<8xf32>
    %53 = vector.multi_reduction <maximumf>, %52, %cst_25 [1] : vector<8x128xf32> to vector<8xf32>
    %54 = vector.shape_cast %53 : vector<8xf32> to vector<8x1xf32>
    %cst_26 = arith.constant 0x7F800000 : f32
    %55 = vector.broadcast %cst_26 : f32 to vector<8x128xf32>
    %56 = arith.select %29, %23, %55 : vector<8x128xi1>, vector<8x128xf32>
    %cst_27 = arith.constant dense<0x7F800000> : vector<8xf32>
    %57 = vector.multi_reduction <minimumf>, %56, %cst_27 [1] : vector<8x128xf32> to vector<8xf32>
    %58 = vector.shape_cast %57 : vector<8xf32> to vector<8x1xf32>
    %cst_28 = arith.constant 0.000000e+00 : f32
    %59 = vector.broadcast %cst_28 : f32 to vector<8x1xf32>
    %60 = arith.cmpf ogt, %36, %59 : vector<8x1xf32>
    %61 = arith.addf %54, %58 : vector<8x1xf32>
    %cst_29 = arith.constant 5.000000e-01 : f32
    %62 = vector.broadcast %cst_29 : f32 to vector<8x1xf32>
    %63 = arith.mulf %61, %62 : vector<8x1xf32>
    %cst_30 = arith.constant 0.000000e+00 : f32
    %64 = vector.broadcast %cst_30 : f32 to vector<8x1xf32>
    %65 = arith.select %60, %63, %64 : vector<8x1xi1>, vector<8x1xf32>
    %66 = vector.shape_cast %65 : vector<8x1xf32> to vector<8x1xf32>
    %67 = vector.broadcast %66 : vector<8x1xf32> to vector<8x128xf32>
    %68 = arith.select %29, %23, %67 : vector<8x128xi1>, vector<8x128xf32>
    %69 = vector.broadcast %65 : vector<8x1xf32> to vector<8x128xf32>
    %70 = arith.subf %68, %69 : vector<8x128xf32>
    %cst_31 = arith.constant -1.600000e+01 : f32
    %71 = vector.broadcast %cst_31 : f32 to vector<8x128xf32>
    %72 = arith.mulf %71, %70 : vector<8x128xf32>
    %73 = math.exp %72 : vector<8x128xf32>
    %74 = arith.mulf %73, %34 : vector<8x128xf32>
    %cst_32 = arith.constant dense<0.000000e+00> : vector<8xf32>
    %75 = vector.multi_reduction <add>, %74, %cst_32 [1] : vector<8x128xf32> to vector<8xf32>
    %76 = vector.shape_cast %75 : vector<8xf32> to vector<8x1xf32>
    %77 = arith.mulf %73, %31 : vector<8x128xf32>
    %cst_33 = arith.constant dense<0.000000e+00> : vector<8xf32>
    %78 = vector.multi_reduction <add>, %77, %cst_33 [1] : vector<8x128xf32> to vector<8xf32>
    %79 = vector.shape_cast %78 : vector<8xf32> to vector<8x1xf32>
    %80 = arith.divf %76, %79 : vector<8x1xf32>
    %81 = math.log %80 : vector<8x1xf32>
    %cst_34 = arith.constant 0.000000e+00 : f32
    %82 = vector.broadcast %cst_34 : f32 to vector<8x1xf32>
    %83 = arith.subf %82, %81 : vector<8x1xf32>
    %c0_35 = arith.constant 0 : index
    %84 = memref.load %arg1[%c0_35] : memref<1xi32, #tpu.memory_space<smem>>
    %c8_i32 = arith.constant 8 : i32
    %85 = arith.muli %arg0, %c8_i32 : i32
    %86 = tpu.iota {dimensions = array<i32: 0>} : vector<8x1xi32>
    %87 = vector.broadcast %85 : i32 to vector<8x1xi32>
    %88 = arith.addi %87, %86 : vector<8x1xi32>
    %89 = vector.broadcast %84 : i32 to vector<8x1xi32>
    %90 = arith.cmpi slt, %88, %89 : vector<8x1xi32>
    %cst_36 = arith.constant 3.000000e-01 : f32
    %91 = vector.broadcast %cst_36 : f32 to vector<8x1xf32>
    %92 = arith.cmpf olt, %83, %91 : vector<8x1xf32>
    %93 = arith.andi %90, %92 : vector<8x1xi1>
    %cst_37 = arith.constant 1.000000e+00 : f32
    %cst_38 = arith.constant 0.000000e+00 : f32
    %94 = vector.broadcast %cst_37 : f32 to vector<8x1xf32>
    %95 = vector.broadcast %cst_38 : f32 to vector<8x1xf32>
    %96 = arith.select %93, %94, %95 : vector<8x1xi1>, vector<8x1xf32>
    %cst_39 = arith.constant 0.000000e+00 : f32
    %97 = vector.broadcast %cst_39 : f32 to vector<8x1xf32>
    %98 = arith.select %90, %83, %97 : vector<8x1xi1>, vector<8x1xf32>
    %cst_40 = arith.constant 0.000000e+00 : f32
    %99 = vector.broadcast %cst_40 : f32 to vector<8x1xf32>
    %100 = arith.select %90, %50, %99 : vector<8x1xi1>, vector<8x1xf32>
    %cst_41 = arith.constant 0.000000e+00 : f32
    %101 = vector.broadcast %cst_41 : f32 to vector<8x1xf32>
    %102 = arith.select %90, %44, %101 : vector<8x1xi1>, vector<8x1xf32>
    %cst_42 = arith.constant dense<0.000000e+00> : vector<1xf32>
    %103 = vector.multi_reduction <add>, %98, %cst_42 [0] : vector<8x1xf32> to vector<1xf32>
    %104 = vector.shape_cast %103 : vector<1xf32> to vector<1x1xf32>
    %cst_43 = arith.constant dense<0.000000e+00> : vector<1xf32>
    %105 = vector.multi_reduction <add>, %96, %cst_43 [0] : vector<8x1xf32> to vector<1xf32>
    %106 = vector.shape_cast %105 : vector<1xf32> to vector<1x1xf32>
    %cst_44 = arith.constant dense<0.000000e+00> : vector<1xf32>
    %107 = vector.multi_reduction <add>, %100, %cst_44 [0] : vector<8x1xf32> to vector<1xf32>
    %108 = vector.shape_cast %107 : vector<1xf32> to vector<1x1xf32>
    %cst_45 = arith.constant dense<0.000000e+00> : vector<1xf32>
    %109 = vector.multi_reduction <add>, %102, %cst_45 [0] : vector<8x1xf32> to vector<1xf32>
    %110 = vector.shape_cast %109 : vector<1xf32> to vector<1x1xf32>
    %111 = tpu.iota {dimensions = array<i32: 1>} : vector<1x128xi32>
    %c0_i32_46 = arith.constant 0 : i32
    %112 = vector.broadcast %c0_i32_46 : i32 to vector<1x128xi32>
    %113 = arith.cmpi eq, %111, %112 : vector<1x128xi32>
    %cst_47 = arith.constant 0.000000e+00 : f32
    %114 = vector.shape_cast %104 : vector<1x1xf32> to vector<1x1xf32>
    %115 = vector.broadcast %114 : vector<1x1xf32> to vector<1x128xf32>
    %116 = vector.broadcast %cst_47 : f32 to vector<1x128xf32>
    %117 = arith.select %113, %115, %116 : vector<1x128xi1>, vector<1x128xf32>
    %c1_i32 = arith.constant 1 : i32
    %118 = vector.broadcast %c1_i32 : i32 to vector<1x128xi32>
    %119 = arith.cmpi eq, %111, %118 : vector<1x128xi32>
    %cst_48 = arith.constant 0.000000e+00 : f32
    %120 = vector.shape_cast %106 : vector<1x1xf32> to vector<1x1xf32>
    %121 = vector.broadcast %120 : vector<1x1xf32> to vector<1x128xf32>
    %122 = vector.broadcast %cst_48 : f32 to vector<1x128xf32>
    %123 = arith.select %119, %121, %122 : vector<1x128xi1>, vector<1x128xf32>
    %124 = arith.addf %117, %123 : vector<1x128xf32>
    %c2_i32 = arith.constant 2 : i32
    %125 = vector.broadcast %c2_i32 : i32 to vector<1x128xi32>
    %126 = arith.cmpi eq, %111, %125 : vector<1x128xi32>
    %cst_49 = arith.constant 0.000000e+00 : f32
    %127 = vector.shape_cast %108 : vector<1x1xf32> to vector<1x1xf32>
    %128 = vector.broadcast %127 : vector<1x1xf32> to vector<1x128xf32>
    %129 = vector.broadcast %cst_49 : f32 to vector<1x128xf32>
    %130 = arith.select %126, %128, %129 : vector<1x128xi1>, vector<1x128xf32>
    %131 = arith.addf %124, %130 : vector<1x128xf32>
    %c3_i32 = arith.constant 3 : i32
    %132 = vector.broadcast %c3_i32 : i32 to vector<1x128xi32>
    %133 = arith.cmpi eq, %111, %132 : vector<1x128xi32>
    %cst_50 = arith.constant 0.000000e+00 : f32
    %134 = vector.shape_cast %110 : vector<1x1xf32> to vector<1x1xf32>
    %135 = vector.broadcast %134 : vector<1x1xf32> to vector<1x128xf32>
    %136 = vector.broadcast %cst_50 : f32 to vector<1x128xf32>
    %137 = arith.select %133, %135, %136 : vector<1x128xi1>, vector<1x128xf32>
    %138 = arith.addf %131, %137 : vector<1x128xf32>
    %c0_51 = arith.constant 0 : index
    %c0_52 = arith.constant 0 : index
    %139 = vector.load %arg9[%c0_51, %c0_52] : memref<8x128xf32, #tpu.memory_space<vmem>>, vector<8x128xf32>
    %140 = vector.broadcast %138 : vector<1x128xf32> to vector<8x128xf32>
    %141 = arith.addf %139, %140 : vector<8x128xf32>
    %c0_53 = arith.constant 0 : index
    %c0_54 = arith.constant 0 : index
    %142 = vector.load %arg9[%c0_53, %c0_54] : memref<8x128xf32, #tpu.memory_space<vmem>>, vector<8x128xf32>
    tpu.vector_store %arg9[%c0_53, %c0_54], %141 {strides = array<i32>} : memref<8x128xf32, #tpu.memory_space<vmem>>, vector<8x128xf32>,
    return
  }
  func.func @transform_0(%arg0: i32, %arg1: memref<1xi32, #tpu.memory_space<smem>>) -> (i32, i32) {
    %c0_i32 = arith.constant 0 : i32
    %c0_i32_0 = arith.constant 0 : i32
    return %arg0, %c0_i32 : i32, i32
  }
  func.func @transform_1(%arg0: i32, %arg1: memref<1xi32, #tpu.memory_space<smem>>) -> (i32, i32) {
    %c0_i32 = arith.constant 0 : i32
    %c0_i32_0 = arith.constant 0 : i32
    return %arg0, %c0_i32 : i32, i32
  }
  func.func @transform_2(%arg0: i32, %arg1: memref<1xi32, #tpu.memory_space<smem>>) -> (i32, i32) {
    %c0_i32 = arith.constant 0 : i32
    %c0_i32_0 = arith.constant 0 : i32
    return %arg0, %c0_i32 : i32, i32
  }
  func.func @transform_3(%arg0: i32, %arg1: memref<1xi32, #tpu.memory_space<smem>>) -> (i32, i32) {
    %c0_i32 = arith.constant 0 : i32
    %c0_i32_0 = arith.constant 0 : i32
    %c0_i32_1 = arith.constant 0 : i32
    return %c0_i32, %c0_i32_0 : i32, i32
  }
  func.func @transform_4(%arg0: i32, %arg1: memref<1xi32, #tpu.memory_space<smem>>) -> (i32, i32) {
    %c0_i32 = arith.constant 0 : i32
    %c0_i32_0 = arith.constant 0 : i32
    %c0_i32_1 = arith.constant 0 : i32
    return %c0_i32, %c0_i32_0 : i32, i32
  }
  func.func @transform_5(%arg0: i32, %arg1: memref<1xi32, #tpu.memory_space<smem>>) -> (i32, i32) {
    %c0_i32 = arith.constant 0 : i32
    %c0_i32_0 = arith.constant 0 : i32
    %c0_i32_1 = arith.constant 0 : i32
    return %c0_i32, %c0_i32_0 : i32, i32
  }
  func.func @transform_6(%arg0: i32, %arg1: memref<1xi32, #tpu.memory_space<smem>>) -> (i32, i32) {
    %c0_i32 = arith.constant 0 : i32
    %c0_i32_0 = arith.constant 0 : i32
    %c0_i32_1 = arith.constant 0 : i32
    return %c0_i32, %c0_i32_0 : i32, i32
  }
  func.func @transform_7(%arg0: i32, %arg1: memref<1xi32, #tpu.memory_space<smem>>) -> (i32, i32) {
    %c0_i32 = arith.constant 0 : i32
    %c0_i32_0 = arith.constant 0 : i32
    %c0_i32_1 = arith.constant 0 : i32
    return %c0_i32, %c0_i32_0 : i32, i32
  }
}

</mosaic_0001>

<llo_original>
// kernel: tpu_custom_call.1
$region0: #{tpu_custom_call.1}
  #allocation0 [shape = 'u32[]', space=smem, size = 0x4, offset = 0x4, fixed_abs, tag = 'smem constant byte address 0x4 - core index']
  #allocation1 [shape = 'u32[72,128]{1,0:T(1,128)}', space=vmem, size = 0x9000, scoped, tag = 'internal scratch']
  #allocation2 [shape = 's32[8,128]{1,0:T(8,128)}', space=vmem, size = 0x1000, scoped, tag = 'scratch operand']
  #allocation3 [shape = 's32[1]{0}', space=sflag, size = 0x4, scoped, tag = 'scoped memory for tpu_custom_call.1']
  #allocation4 [shape = 's32[1]{0:T(128)S(6)}', space=smem, size = 0x200, scoped, tag = 'prefetched SMEM operand 0']
  %s0 = inlined_call_operand.<no memory space> [shape: s32[1], index: 0, kind: input, shape index: {}]
  %s1 = inlined_call_operand.vmem [shape: f32[8,32], index: 1, kind: input, shape index: {}]
  %s2 = inlined_call_operand.vmem [shape: f32[8,1], index: 2, kind: input, shape index: {}]
  %s3 = inlined_call_operand.vmem [shape: s32[8,2], index: 3, kind: input, shape index: {}]
  %s4 = inlined_call_operand.hbm [shape: f32[32,128], index: 4, kind: input, shape index: {}]
  %s5 = inlined_call_operand.vmem [shape: f32[1,128], index: 5, kind: input, shape index: {}]
  %s6 = inlined_call_operand.vmem [shape: f32[1,128], index: 6, kind: input, shape index: {}]
  %s7 = inlined_call_operand.vmem [shape: s32[1,128], index: 7, kind: input, shape index: {}]
  %s8 = inlined_call_operand.hbm [shape: f32[8,128], index: 8, kind: output, shape index: {}]
  %s9 = sld [smem:[#allocation0]]
  $region46: #{tpu_custom_call.1} parent=0
    _
  %s11 = ssub.s32 1, %s9
  %s12 = scalar_select 0, %s11, %s9
  %13 = sst [smem:[#allocation4]] %s0
  $region1: #{tpu_custom_call.1} parent=0
    #allocation5 [shape = 'u8[16384]{0}', space=vmem, size = 0x4000, scoped, tag = 'input window, operand 4, single buffered']
    #allocation6 [shape = 's32[1]{0}', space=sflag, size = 0x4, scoped, tag = 'scoped memory for tpu_custom_call.1']
    #allocation7 [shape = 's32[1]{0}', space=sflag, size = 0x4, scoped, tag = 'scoped memory for tpu_custom_call.1']
    #allocation8 [shape = 'u8[4096]{0}', space=vmem, size = 0x1000, scoped, tag = 'output window, operand 0, single buffered']
    %14 = vsyncpa [#allocation6], 0
    %15 = vsyncpa [#allocation7], 0
    // Predicated region
    $region2: #{tpu_custom_call.1} parent=1 // pred_check
      _
    $region3: #{tpu_custom_call.1} parent=1 // pred_check_branch
      %17 = sbr.rel (0) target = $region5
    $region4: #{tpu_custom_call.1} parent=1 // pred_region
      _
    $region5: #{tpu_custom_call.1} parent=1 // pred_fallthru
      _
    // Predicated region
    $region6: #{tpu_custom_call.1} parent=1 // pred_check
      _
    $region7: #{tpu_custom_call.1} parent=1 // pred_check_branch
      %19 = sbr.rel (0) target = $region9
    $region8: #{tpu_custom_call.1} parent=1 // pred_region
      _
    $region9: #{tpu_custom_call.1} parent=1 // pred_fallthru
      _
    // Predicated region
    $region10: #{tpu_custom_call.1} parent=1 // pred_check
      _
    $region11: #{tpu_custom_call.1} parent=1 // pred_check_branch
      %21 = sbr.rel (0) target = $region13
    $region12: #{tpu_custom_call.1} parent=1 // pred_region
      _
    $region13: #{tpu_custom_call.1} parent=1 // pred_fallthru
      _
    // Predicated region
    $region14: #{tpu_custom_call.1} parent=1 // pred_check
      _
    $region15: #{tpu_custom_call.1} parent=1 // pred_check_branch
      %23 = sbr.rel (0) target = $region17
    $region16: #{tpu_custom_call.1} parent=1 // pred_region
      %25 = vsyncadd [#allocation6], 0
      %s26 = sshll.u32 %s4, 4
      %s27 = int_to_ptr.hbm [resolvable:$true] %s26
      %s28 = sshll.u32 [#allocation5], 4
      %s29 = int_to_ptr.vmem [resolvable:$true] %s28
      %34 = dma.hbm_to_vmem [thread:$0]  %s27, 512, %s29, [#allocation6], 128, 128, 8
    $region17: #{tpu_custom_call.1} parent=1 // pred_fallthru
      _
    // Predicated region
    $region18: #{tpu_custom_call.1} parent=1 // pred_check
      _
    $region19: #{tpu_custom_call.1} parent=1 // pred_check_branch
      %36 = sbr.rel (0) target = $region21
    $region20: #{tpu_custom_call.1} parent=1 // pred_region
      _
    $region21: #{tpu_custom_call.1} parent=1 // pred_fallthru
      _
    // Predicated region
    $region22: #{tpu_custom_call.1} parent=1 // pred_check
      _
    $region23: #{tpu_custom_call.1} parent=1 // pred_check_branch
      %38 = sbr.rel (0) target = $region25
    $region24: #{tpu_custom_call.1} parent=1 // pred_region
      _
    $region25: #{tpu_custom_call.1} parent=1 // pred_fallthru
      _
    // Predicated region
    $region26: #{tpu_custom_call.1} parent=1 // pred_check
      _
    $region27: #{tpu_custom_call.1} parent=1 // pred_check_branch
      %40 = sbr.rel (0) target = $region29
    $region28: #{tpu_custom_call.1} parent=1 // pred_region
      _
    $region29: #{tpu_custom_call.1} parent=1 // pred_fallthru
      _
    // Predicated region
    $region30: #{tpu_custom_call.1} parent=1 // pred_check
      _
    $region31: #{tpu_custom_call.1} parent=1 // pred_check_branch
      %42 = sbr.rel (0) target = $region33
    $region32: #{tpu_custom_call.1} parent=1 // pred_region
      %44 = dma.done [#allocation6], 512
    $region33: #{tpu_custom_call.1} parent=1 // pred_fallthru
      _
    %p45 = scmp.eq.s32.totalorder 0, 0
    // Predicated region
    $region34: #{tpu_custom_call.1} parent=1 // pred_check
      %p46 = pneg %p45
    $region35: #{tpu_custom_call.1} parent=1 // pred_check_branch
      %48 = sbr.rel (%p46) target = $region37
    $region36: #{tpu_custom_call.1} parent=1 // pred_region
      %49 = vst [vmem:[#allocation8] sm:$0xff] 0.0
      %v50 = vlaneseq
      %v51 = vand.u32 %v50, 127
      %52 = vst [vmem:[#allocation2] sm:$0xff] %v51
    $region37: #{tpu_custom_call.1} parent=1 // pred_fallthru
      _
    %v53 = vld [vmem:[%s3] sm:$0xff]
    %v54 = vld [vmem:[%s1] sm:$0xff]
    %v55 = vld [vmem:[#allocation5] sm:$0xff]
    %v56 = vld [vmem:[#allocation5 + $0x8] sm:$0xff]
    %v57 = vld [vmem:[#allocation5 + $0x10] sm:$0xff]
    %v58 = vld [vmem:[#allocation5 + $0x18] sm:$0xff]
    %vm59 = vcmask 261120
    %v61 = vsel %vm59, %v54, 0
    %63 = vmatpush.msra.mxu0 0.0
    %64 = vmatpush.msra.mxu0 0.0
    %65 = vmatpush.msra.mxu0 0.0
    %66 = vmatpush.msra.mxu0 0.0
    %67 = vmatpush.msra.mxu0 0.0
    %68 = vmatpush.msra.mxu0 0.0
    %69 = vmatpush.msra.mxu0 0.0
    %70 = vmatpush.msra.mxu0 0.0
    %71 = vmatpush.msra.mxu0 0.0
    %72 = vmatpush.msra.mxu0 0.0
    %73 = vmatpush.msra.mxu0 0.0
    %74 = vmatpush.msra.mxu0 0.0
    %75 = vmatpush.msra.mxu0 %v58
    %76 = vmatpush.msra.mxu0 %v57
    %77 = vmatpush.msra.mxu0 %v56
    %78 = vmatpush.msra.mxu0 %v55
    %79 = vmatmul.f32.gmra.mxu0 %v61
    %v80 = vpop.f32.mrf.mxu0
    %v81 = vadd.f32 0.0, %v80
    %82 = vdwg.mxu0
    %v83 = vld [vmem:[%s2] sm:$0xff]
    %v84 = vld [vmem:[%s5] sm:$0x1]
    %86 = vset.pattern.permute.xlu0 0
    %87 = vperm.xlu0 %86, %v83
    %v88 = vpop.permute.xlu0 %87
    %v91 = vperm.slane %v84, 0
    %v93 = vadd.f32 %v88, %v91
    %v94 = vsub.f32 %v93, %v81
    %v95 = vld [vmem:[#allocation2] sm:$0xff]
    %96 = vset.pattern.permute.xlu0 1
    %97 = vperm.xlu0 %96, %v53
    %v98 = vpop.permute.xlu0 %97
    %vm99 = vcmp.eq.s32.totalorder %v95, %v98
    %v100 = vld [vmem:[%s6] sm:$0x1]
    %v102 = vperm.slane %v100, 0
    %v104 = vsel %vm99, %v102, 1.0
    %v105 = vmul.f32 %v94, %v104
    %v106 = vld [vmem:[%s7] sm:$0x1]
    %107 = vset.pattern.permute.xlu0 0
    %108 = vperm.xlu0 %107, %v53
    %v109 = vpop.permute.xlu0 %108
    %v110 = vperm.slane %v106, 0
    %vm111 = vcmp.eq.s32.totalorder %v109, %v110
    %vm112 = vcmp.gt.f32.partialorder %v105, 0.001
    %v113 = vsel %vm112, 1, 0
    %v114 = vcvt.s32.f32 %v113
    %vm115 = vmand %vm111, %vm112
    %v116 = vsel %vm115, 1, 0
    %v117 = vcvt.s32.f32 %v116
    %118 = vadd.xlane.f32.xlu0 %v114
    %v119 = vpop.xlane.xlu0 %118
    %120 = vadd.xlane.f32.xlu0 %v117
    %v121 = vpop.xlane.xlu0 %120
    %v122 = vmul.f32 %v105, %v114
    %123 = vadd.xlane.f32.xlu0 %v122
    %v124 = vpop.xlane.xlu0 %123
    %v125 = vmax.f32 %v119, 1.0
    %v126 = vrcp.pop %v125
    %v127 = vmul.f32 %v125, %v126
    %v128 = vsub.f32 1.0, %v127
    %v129 = vmul.f32 %v126, %v128
    %v130 = vadd.f32 %v126, %v129
    %vm131 = vweird.f32 %v125
    %vm132 = vweird.f32 %v126
    %vm133 = vmor %vm131, %vm132
    %v134 = vsel %vm133, %v126, %v130
    %v135 = vand.u32 2147483647, %v125
    %vm136 = vcmp.eq.f32.partialorder %v135, 8.507059e+37
    %v137 = vand.u32 %v125, 2147483648
    %v138 = vor.u32 1.1754944e-38, %v137
    %v139 = vsel %vm136, %v138, %v134
    %v140 = vmul.f32 %v124, %v139
    %v141 = vmul.f32 %v105, %v117
    %142 = vadd.xlane.f32.xlu0 %v141
    %v143 = vpop.xlane.xlu0 %142
    %v144 = vmax.f32 %v121, 1.0
    %v145 = vrcp.pop %v144
    %v146 = vmul.f32 %v144, %v145
    %v147 = vsub.f32 1.0, %v146
    %v148 = vmul.f32 %v145, %v147
    %v149 = vadd.f32 %v145, %v148
    %vm150 = vweird.f32 %v144
    %vm151 = vweird.f32 %v145
    %vm152 = vmor %vm150, %vm151
    %v153 = vsel %vm152, %v145, %v149
    %v154 = vand.u32 2147483647, %v144
    %vm155 = vcmp.eq.f32.partialorder %v154, 8.507059e+37
    %v156 = vand.u32 %v144, 2147483648
    %v157 = vor.u32 1.1754944e-38, %v156
    %v158 = vsel %vm155, %v157, %v153
    %v159 = vmul.f32 %v143, %v158
    %v160 = vsel %vm112, %v105, -inf
    %161 = vmax.xlane.f32.xlu0 %v160
    %v162 = vpop.xlane.xlu0 %161
    %v163 = vsel %vm112, %v105, inf
    %164 = vmin.xlane.f32.xlu0 %v163
    %v165 = vpop.xlane.xlu0 %164
    %vm166 = vcmp.gt.f32.partialorder %v119, 0.0
    %v167 = vadd.f32 %v162, %v165
    %v168 = vmul.f32 %v167, 0.5
    %v169 = vsel %vm166, %v168, 0.0
    %v170 = vsel %vm112, %v105, %v169
    %v171 = vsub.f32 %v170, %v169
    %v172 = vmul.f32 %v171, -16.0
    %v173 = vmul.f32 %v172, 1.442695
    %v174 = vpow.pop %v173
    %v175 = vmul.f32 %v174, %v117
    %176 = vadd.xlane.f32.xlu0 %v175
    %v177 = vpop.xlane.xlu0 %176
    %v178 = vmul.f32 %v174, %v114
    %179 = vadd.xlane.f32.xlu0 %v178
    %v180 = vpop.xlane.xlu0 %179
    %v181 = vrcp.pop %v180
    %v182 = vmul.f32 %v180, %v181
    %v183 = vsub.f32 1.0, %v182
    %v184 = vmul.f32 %v181, %v183
    %v185 = vadd.f32 %v181, %v184
    %vm186 = vweird.f32 %v180
    %vm187 = vweird.f32 %v181
    %vm188 = vmor %vm186, %vm187
    %v189 = vsel %vm188, %v181, %v185
    %v190 = vand.u32 2147483647, %v180
    %vm191 = vcmp.eq.f32.partialorder %v190, 8.507059e+37
    %v192 = vand.u32 %v180, 2147483648
    %v193 = vor.u32 1.1754944e-38, %v192
    %v194 = vsel %vm191, %v193, %v189
    %v195 = vmul.f32 %v177, %v194
    %v196 = vlog2.pop %v195
    %v197 = vmul.f32 %v196, 0.6931472
    %v198 = vsub.f32 0.0, %v197
    %s199 = sld [smem:[#allocation4]]
    %s200 = smul.u32 0, 8
    %v201 = vlaneseq
    %v202 = vshrl.u32 %v201, 7
    %v203 = vstv %s200
    %v204 = vadd.s32 %v203, %v202
    %v205 = vstv %s199
    %vm206 = vcmp.lt.s32.totalorder %v204, %v205
    %vm207 = vcmp.lt.f32.partialorder %v198, 0.3
    %vm208 = vmand %vm206, %vm207
    %v209 = vsel %vm208, 1.0, 0.0
    %v210 = vsel %vm206, %v198, 0.0
    %v211 = vsel %vm206, %v159, 0.0
    %v212 = vsel %vm206, %v140, 0.0
    %v213 = vrot.slane %v210, 4
    %v214 = vadd.f32 %v210, %v213
    %v215 = vrot.slane %v214, 2
    %v216 = vadd.f32 %v214, %v215
    %v217 = vrot.slane %v216, 1
    %v218 = vadd.f32 %v216, %v217
    %v219 = vrot.slane %v209, 4
    %v220 = vadd.f32 %v209, %v219
    %v221 = vrot.slane %v220, 2
    %v222 = vadd.f32 %v220, %v221
    %v223 = vrot.slane %v222, 1
    %v224 = vadd.f32 %v222, %v223
    %v225 = vrot.slane %v211, 4
    %v226 = vadd.f32 %v211, %v225
    %v227 = vrot.slane %v226, 2
    %v228 = vadd.f32 %v226, %v227
    %v229 = vrot.slane %v228, 1
    %v230 = vadd.f32 %v228, %v229
    %v231 = vrot.slane %v212, 4
    %v232 = vadd.f32 %v212, %v231
    %v233 = vrot.slane %v232, 2
    %v234 = vadd.f32 %v232, %v233
    %v235 = vrot.slane %v234, 1
    %v236 = vadd.f32 %v234, %v235
    %v237 = vlaneseq
    %v238 = vand.u32 %v237, 127
    %vm239 = vcmp.eq.s32.totalorder %v238, 0
    %v240 = vsel %vm239, %v218, 0.0
    %vm241 = vcmp.eq.s32.totalorder %v238, 1
    %v242 = vsel %vm241, %v224, 0.0
    %v243 = vadd.f32 %v240, %v242
    %vm244 = vcmp.eq.s32.totalorder %v238, 2
    %v245 = vsel %vm244, %v230, 0.0
    %v246 = vadd.f32 %v243, %v245
    %vm247 = vcmp.eq.s32.totalorder %v238, 3
    %v248 = vsel %vm247, %v236, 0.0
    %v249 = vadd.f32 %v246, %v248
    %v250 = vld [vmem:[#allocation8] sm:$0xff]
    %v251 = vadd.f32 %v250, %v249
    %252 = vst [vmem:[#allocation8] sm:$0xff] %v251
    // Predicated region
    $region38: #{tpu_custom_call.1} parent=1 // pred_check
      _
    $region39: #{tpu_custom_call.1} parent=1 // pred_check_branch
      %254 = sbr.rel (0) target = $region41
    $region40: #{tpu_custom_call.1} parent=1 // pred_region
      %256 = vsyncadd [#allocation7], 0
      %s258 = sshll.u32 [#allocation8], 4
      %s259 = int_to_ptr.vmem [resolvable:$true] %s258
      %s260 = sshll.u32 %s8, 4
      %s261 = int_to_ptr.hbm [resolvable:$true] %s260
      %263 = dma.vmem_to_hbm [thread:$0]  %s259, 128, %s261, [#allocation7]
    $region41: #{tpu_custom_call.1} parent=1 // pred_fallthru
      _
    // Predicated region
    $region42: #{tpu_custom_call.1} parent=1 // pred_check
      _
    $region43: #{tpu_custom_call.1} parent=1 // pred_check_branch
      %265 = sbr.rel (0) target = $region45
    $region44: #{tpu_custom_call.1} parent=1 // pred_region
      %267 = dma.done [#allocation7], 128
    $region45: #{tpu_custom_call.1} parent=1 // pred_fallthru
      _
    %268 = vsyncpa [#allocation6], 1
    %269 = vsyncpa [#allocation7], 1

</llo_original>
